<compile_context>
chip_gen: v7x
topology: tpu7x:2x2x1
jax: 0.10.0
libtpu: 0.0.40
codegen_flags: <defaults>
</compile_context>

<pallas_src>
import functools

import numpy as np
import jax
import jax.numpy as jnp
from jax.experimental import pallas as pl
from jax.experimental.pallas import tpu as pltpu

REG_MAX = 7          # cfg.reg_max (NanoDet default) -> 8 bins per distribution
GROUPS_PER_ROW = 128  # distributions packed per kernel row (lane-dense output)


def _cdiv(a, b):
    return -(-a // b)


def _round_up(a, b):
    return _cdiv(a, b) * b


def _integral_kernel(a_ref, x_ref, o_ref, *, approx_recip):
    # x_ref: (tile, W) lane-dense logits.  a_ref: (W, 256) resident constant.
    x = x_ref[...].astype(jnp.float32)

    # Stabilizing shift: the per-row max >= every per-distribution max, and
    # softmax is invariant under a shift shared by a whole distribution, so the
    # result matches the per-distribution reference up to f32 rounding.
    # Latent hazard (documented, unchanged from review): if *every* logit of a
    # distribution sits > ~88 below the row max, its exp-sums underflow to 0
    # and y = 0/0; unreachable for typical detection logits.
    m = jnp.max(x, axis=-1, keepdims=True)
    e = jnp.exp(x - m)                       # dense EUP work (v7x critical slot)
    # TODO(synk): optionally run exp in bf16 on v6e/v7x (bf16 EUP path) behind a
    # flag; it changes numerics beyond the 1e-4 self-test, so it stays off.

    # One MXU matmul reduces the (reg_max+1)-bin distributions AND compacts the
    # results into a lane-dense (tile, 256) slab.
    red = jnp.dot(e.astype(a_ref.dtype), a_ref[...],
                  preferred_element_type=jnp.float32)
    g = o_ref.shape[-1]                      # 128 distributions per row
    s = red[:, :g]                           # denominators  sum(e)     (vreg-aligned slice)
    t = red[:, g:]                           # numerators    sum(e*bin)
    o_ref[...] = (t * pl.reciprocal(s, approx=approx_recip)).astype(o_ref.dtype)


def _projection_matrix(reg_max, dtype):
    """(W, 256) constant: [one-hot segment sum | weighted (0..reg_max) sum]."""
    r = reg_max + 1
    w_lanes = GROUPS_PER_ROW * r
    lane = np.arange(w_lanes)
    onehot = (lane[:, None] // r == np.arange(GROUPS_PER_ROW)[None, :])
    onehot = onehot.astype(np.float32)
    wgt = (lane % r).astype(np.float32)[:, None]        # project = 0..reg_max
    return jnp.asarray(np.concatenate([onehot, onehot * wgt], axis=1),
                       dtype=dtype)


@functools.partial(
    jax.jit,
    static_argnames=("reg_max", "block_rows", "mxu_dtype", "approx_recip"))
def integral_forward(x, *, reg_max=REG_MAX, block_rows=512,
                     mxu_dtype=jnp.float32, approx_recip=False):
    r = reg_max + 1
    w_lanes = GROUPS_PER_ROW * r            # one row = 128 whole distributions
    flat = x.reshape(-1)                    # row-major, identical to torch reshape
    n = flat.shape[0]
    assert n % (4 * r) == 0, "numel must be divisible by 4*(reg_max+1)"
    n_dists = n // r

    n_rows = _cdiv(n_dists, GROUPS_PER_ROW)
    assert block_rows % 8 == 0
    if n_rows <= 8:
        tile = n_rows                       # single step; block == full array
    else:
        # >= 2 grid steps so ("parallel",) can use both v7x TensorCores; cap at
        # block_rows.  For very large inputs on v6e/v5e raise block_rows to
        # amortize the ~0.35us/step overhead (re-derive VMEM first on v7x).
        tile = min(block_rows, _round_up(_cdiv(n_rows, 2), 8))
    n_rows_pad = _round_up(n_rows, tile)

    pad = n_rows_pad * w_lanes - n
    if pad:
        # Zero logits in the (rare) ragged tail give a uniform softmax in the
        # padded distributions, which are sliced off below.
        # TODO(synk): for large ragged inputs, mask the tail in-kernel (scalar
        # prefetch the valid length + iota compare) instead of this host copy.
        flat = jnp.pad(flat, (0, pad))
    xd = flat.reshape(n_rows_pad, w_lanes)  # free metadata reshape when pad==0

    a = _projection_matrix(reg_max, mxu_dtype)

    out = pl.pallas_call(
        functools.partial(_integral_kernel, approx_recip=approx_recip),
        out_shape=jax.ShapeDtypeStruct((n_rows_pad, GROUPS_PER_ROW), x.dtype),
        grid_spec=pltpu.PrefetchScalarGridSpec(
            num_scalar_prefetch=0,
            grid=(n_rows_pad // tile,),
            in_specs=[
                # Constant index_map -> DMA'd once, stays resident in VMEM.
                pl.BlockSpec((w_lanes, 2 * GROUPS_PER_ROW), lambda i: (0, 0)),
                pl.BlockSpec((tile, w_lanes), lambda i: (i, 0)),
            ],
            out_specs=pl.BlockSpec((tile, GROUPS_PER_ROW), lambda i: (i, 0)),
        ),
        compiler_params=pltpu.CompilerParams(
            dimension_semantics=("parallel",),   # shards steps across v7x TCs
            vmem_limit_bytes=32 * 1024 * 1024,
        ),
    )(a, xd)

    # out[p, l] is the expectation of flat distribution p*128 + l, so these are
    # free metadata reshapes, matching torch's .reshape(-1, 4).
    return out.reshape(-1)[:n_dists].reshape(-1, 4)


def _reference(x, reg_max=REG_MAX):
    r = reg_max + 1
    xf = x.reshape(-1, r).astype(jnp.float32)
    p = jax.nn.softmax(xf, axis=1)
    proj = jnp.linspace(0.0, reg_max, r, dtype=jnp.float32)
    return (p @ proj).reshape(-1, 4)


def _check(x, reg_max):
    out = integral_forward(x, reg_max=reg_max)
    jax.block_until_ready(out)
    ref = _reference(x, reg_max=reg_max)
    expected_rows = x.size // (4 * (reg_max + 1))
    assert out.shape == ref.shape == (expected_rows, 4), (out.shape, ref.shape)
    err = jnp.max(jnp.abs(out.astype(jnp.float32) - ref))
    assert err < 1e-4, f"max abs err {err}"


if __name__ == "__main__":
    key = jax.random.PRNGKey(0)
    k1, k2, k3 = jax.random.split(key, 3)

    # Typical NanoDet Integral input: (B, 4*(reg_max+1), H, W) NCHW logits.
    x1 = jax.random.normal(k1, (2, 4 * (REG_MAX + 1), 16, 16), dtype=jnp.float32)
    _check(x1, REG_MAX)                      # 2 grid steps, no padding

    # Small / ragged case: exercises the padded-tail path and tiny tiles.
    x2 = jax.random.normal(k2, (1, 4 * (REG_MAX + 1), 10, 10), dtype=jnp.float32)
    _check(x2, REG_MAX)

    # GFL-style head: reg_max = 16 (17 bins does not divide 128; handled now).
    x3 = jax.random.normal(k3, (1, 4 * 17, 8, 8), dtype=jnp.float32)
    _check(x3, 16)

    print("KERNEL_OK")
</pallas_src>

<mosaic_0001>
module attributes {stable_mosaic.version = 11 : i64} {
  func.func @_integral_kernel(%arg0: i32, %arg1: memref<1024x256xf32, #tpu.memory_space<vmem>>, %arg2: memref<8x1024xf32, #tpu.memory_space<vmem>>, %arg3: memref<8x128xf32, #tpu.memory_space<vmem>>) attributes {dimension_semantics = [#tpu.dimension_semantics<parallel>], iteration_bounds = array<i64: 2>, scalar_prefetch = 0 : i64, scratch_operands = 0 : i64, tpu.core_type = #tpu.core_type<tc>, window_params = [{pipeline_mode = #tpu.pipeline_mode<synchronous>, transform_indices = @transform_0, window_bounds = array<i64: 1024, 256>}, {transform_indices = @transform_1, window_bounds = array<i64: 8, 1024>}, {transform_indices = @transform_2, window_bounds = array<i64: 8, 128>}]} {
    %c0 = arith.constant 0 : index
    %c0_0 = arith.constant 0 : index
    %0 = vector.load %arg2[%c0, %c0_0] : memref<8x1024xf32, #tpu.memory_space<vmem>>, vector<8x1024xf32>
    %cst = arith.constant dense<0xFF800000> : vector<8xf32>
    %1 = vector.multi_reduction <maximumf>, %0, %cst [1] : vector<8x1024xf32> to vector<8xf32>
    %2 = vector.shape_cast %1 : vector<8xf32> to vector<8x1xf32>
    %3 = vector.broadcast %2 : vector<8x1xf32> to vector<8x1024xf32>
    %4 = arith.subf %0, %3 : vector<8x1024xf32>
    %5 = math.exp %4 : vector<8x1024xf32>
    %c0_1 = arith.constant 0 : index
    %c0_2 = arith.constant 0 : index
    %6 = vector.load %arg1[%c0_1, %c0_2] : memref<1024x256xf32, #tpu.memory_space<vmem>>, vector<1024x256xf32>
    %cst_3 = arith.constant dense<0.000000e+00> : vector<8x256xf32>
    %7 = tpu.matmul %5, %6, %cst_3 {dimension_numbers = #tpu.dot_dimension_numbers<[1], [0], [0], [1], [0, 0, 1, 1], [], []>} : vector<8x1024xf32>, vector<1024x256xf32>, vector<8x256xf32> -> vector<8x256xf32>
    %8 = vector.extract_strided_slice %7 {offsets = [0, 0], sizes = [8, 128], strides = [1, 1]} : vector<8x256xf32> to vector<8x128xf32>
    %9 = vector.extract_strided_slice %7 {offsets = [0, 128], sizes = [8, 128], strides = [1, 1]} : vector<8x256xf32> to vector<8x128xf32>
    %10 = tpu.reciprocal %8 : vector<8x128xf32> -> vector<8x128xf32>
    %11 = arith.mulf %9, %10 : vector<8x128xf32>
    %c0_4 = arith.constant 0 : index
    %c0_5 = arith.constant 0 : index
    %12 = vector.load %arg3[%c0_4, %c0_5] : memref<8x128xf32, #tpu.memory_space<vmem>>, vector<8x128xf32>
    tpu.vector_store %arg3[%c0_4, %c0_5], %11 {strides = array<i32>} : memref<8x128xf32, #tpu.memory_space<vmem>>, vector<8x128xf32>,
    return
  }
  func.func @transform_0(%arg0: i32) -> (i32, i32) {
    %c0_i32 = arith.constant 0 : i32
    %c0_i32_0 = arith.constant 0 : i32
    %c0_i32_1 = arith.constant 0 : i32
    return %c0_i32, %c0_i32_0 : i32, i32
  }
  func.func @transform_1(%arg0: i32) -> (i32, i32) {
    %c0_i32 = arith.constant 0 : i32
    %c0_i32_0 = arith.constant 0 : i32
    return %arg0, %c0_i32 : i32, i32
  }
  func.func @transform_2(%arg0: i32) -> (i32, i32) {
    %c0_i32 = arith.constant 0 : i32
    %c0_i32_0 = arith.constant 0 : i32
    return %arg0, %c0_i32 : i32, i32
  }
}

</mosaic_0001>

<llo_original>
// kernel: integral_forward.1
$region0: #{integral_forward.1}
  #allocation0 [shape = 'u32[]', space=smem, size = 0x4, offset = 0x4, fixed_abs, tag = 'smem constant byte address 0x4 - core index']
  #allocation1 [shape = 'u32[144,128]{1,0:T(1,128)}', space=vmem, size = 0x12000, scoped, tag = 'internal scratch']
  %s0 = inlined_call_operand.vmem [shape: f32[1024,256], index: 0, kind: input, shape index: {}]
  %s1 = inlined_call_operand.vmem [shape: f32[16,1024], index: 1, kind: input, shape index: {}]
  %s2 = inlined_call_operand.vmem [shape: f32[16,128], index: 2, kind: output, shape index: {}]
  %s3 = sld [smem:[#allocation0]]
  $region41: #{integral_forward.1} parent=0
    _
  %s5 = ssub.s32 1, %s3
  %s6 = scalar_select 0, %s5, %s3
  loop: start=0, step=1, limit=4
  $region2: #{integral_forward.1} parent=0 // loop_pre_header
    _
  $region3: #{integral_forward.1} parent=0 // loop_header
    %s8 = sphi 0, %s12
    %p9 = scmp.ge.s32.totalorder %s8, 4
    %s16 = sphi 0, %s16
    %s18 = sphi 0, %s16
    %s19 = sphi 0, %s18
    %s33 = sphi 0, %s19
    %s39 = sphi 0, %s41
    %s42 = sphi 0, %s39
    %s43 = sphi 0, %s42
    %s59 = sphi 0, %s43
    %s65 = sphi 0, %s67
    %s68 = sphi 0, %s65
    %s69 = sphi 0, %s68
    %s85 = sphi 0, %s69
  $region4: #{integral_forward.1} parent=0 // loop_header_branch
    %11 = sbr.rel (%p9) target = $region8
  $region5: #{integral_forward.1} parent=0 // loop_body
    %s13 = ssub.s32 %s8, 1
    %s14 = ssub.s32 %s8, 2
    %s15 = sadd.s32 %s8, 1
    %s17 = sadd.s32 %s16, 1
    %p20 = scmp.eq.s32.totalorder %s8, 1
    %p21 = scmp.ne.s32.totalorder %s16, %s18
    %p22 = scmp.eq.s32.totalorder %s8, 0
    %p23 = por %p21, %p22
    %p24 = scmp.ne.s32.totalorder %s16, %s18
    %p25 = scmp.eq.s32.totalorder %s13, 1
    %p26 = por %p24, %p25
    %p27 = scmp.ne.s32.totalorder %s18, %s19
    %p28 = scmp.eq.s32.totalorder %s13, 0
    %p29 = por %p27, %p28
    %p30 = scmp.ne.s32.totalorder %s18, %s19
    %p31 = scmp.eq.s32.totalorder %s14, 1
    %p32 = por %p30, %p31
    %p34 = scmp.ne.s32.totalorder %s19, %s33
    %p35 = scmp.eq.s32.totalorder %s14, 0
    %p36 = por %p34, %p35
    %s37 = ssub.s32 %s8, %s15
    %p38 = scmp.eq.s32.totalorder %s37, 0
    %s40 = sadd.s32 %s39, 1
    %s41 = scalar_select %p38, %s39, %s40
    %p44 = pneg %p38
    %p45 = scmp.eq.s32.totalorder %s8, 1
    %p46 = por %p44, %p45
    %p47 = scmp.ne.s32.totalorder %s39, %s42
    %p48 = scmp.eq.s32.totalorder %s8, 0
    %p49 = por %p47, %p48
    %p50 = scmp.ne.s32.totalorder %s39, %s42
    %p51 = scmp.eq.s32.totalorder %s13, 1
    %p52 = por %p50, %p51
    %p53 = scmp.ne.s32.totalorder %s42, %s43
    %p54 = scmp.eq.s32.totalorder %s13, 0
    %p55 = por %p53, %p54
    %p56 = scmp.ne.s32.totalorder %s42, %s43
    %p57 = scmp.eq.s32.totalorder %s14, 1
    %p58 = por %p56, %p57
    %p60 = scmp.ne.s32.totalorder %s43, %s59
    %p61 = scmp.eq.s32.totalorder %s14, 0
    %p62 = por %p60, %p61
    %s63 = ssub.s32 %s8, %s15
    %p64 = scmp.eq.s32.totalorder %s63, 0
    %s66 = sadd.s32 %s65, 1
    %s67 = scalar_select %p64, %s65, %s66
    %p70 = pneg %p64
    %p71 = scmp.eq.s32.totalorder %s8, 1
    %p72 = por %p70, %p71
    %p73 = scmp.ne.s32.totalorder %s65, %s68
    %p74 = scmp.eq.s32.totalorder %s8, 0
    %p75 = por %p73, %p74
    %p76 = scmp.ne.s32.totalorder %s65, %s68
    %p77 = scmp.eq.s32.totalorder %s13, 1
    %p78 = por %p76, %p77
    %p79 = scmp.ne.s32.totalorder %s68, %s69
    %p80 = scmp.eq.s32.totalorder %s13, 0
    %p81 = por %p79, %p80
    %p82 = scmp.ne.s32.totalorder %s68, %s69
    %p83 = scmp.eq.s32.totalorder %s14, 1
    %p84 = por %p82, %p83
    %p86 = scmp.ne.s32.totalorder %s69, %s85
    %p87 = scmp.eq.s32.totalorder %s14, 0
    %p88 = por %p86, %p87
    %p89 = scmp.le.s32.totalorder 1, %s8
    %p90 = scmp.lt.s32.totalorder %s8, 3
    %p91 = pnand %p89, %p90
    %p92 = pneg %p91
    // Predicated region
    $region9: #{integral_forward.1} parent=5 // pred_check
      _
    $region10: #{integral_forward.1} parent=5 // pred_check_branch
      %94 = sbr.rel (%p91) target = $region12
    $region11: #{integral_forward.1} parent=5 // pred_region
      %s95 = ssub.s32 %s8, 1
      // Predicated region
      $region13: #{integral_forward.1} parent=11 // pred_check
        %p96 = pneg %p29
      $region14: #{integral_forward.1} parent=11 // pred_check_branch
        %98 = sbr.rel (%p96) target = $region16
      $region15: #{integral_forward.1} parent=11 // pred_region
        _
      $region16: #{integral_forward.1} parent=11 // pred_fallthru
        _
    $region12: #{integral_forward.1} parent=5 // pred_fallthru
      _
    %p99 = scmp.lt.s32.totalorder %s8, 2
    // Predicated region
    $region17: #{integral_forward.1} parent=5 // pred_check
      %p100 = pneg %p99
    $region18: #{integral_forward.1} parent=5 // pred_check_branch
      %102 = sbr.rel (%p100) target = $region20
    $region19: #{integral_forward.1} parent=5 // pred_region
      // Predicated region
      $region21: #{integral_forward.1} parent=19 // pred_check
        %p103 = pneg %p49
      $region22: #{integral_forward.1} parent=19 // pred_check_branch
        %105 = sbr.rel (%p103) target = $region24
      $region23: #{integral_forward.1} parent=19 // pred_region
        %p106 = scmp.lt.s32.totalorder %s8, 1
        %s107 = scalar_select %p106, %s8, 1
        %s108 = smul.addr %s107, 8
        %s109 = smul.addr %s108, 8
        %s110 = scalar_lea.vmem %s1, %s109
      $region24: #{integral_forward.1} parent=19 // pred_fallthru
        _
    $region20: #{integral_forward.1} parent=5 // pred_fallthru
      _
    %p111 = scmp.le.s32.totalorder 1, %s8
    %p112 = scmp.lt.s32.totalorder %s8, 3
    %p113 = pnand %p111, %p112
    %p114 = pneg %p113
    // Predicated region
    $region25: #{integral_forward.1} parent=5 // pred_check
      _
    $region26: #{integral_forward.1} parent=5 // pred_check_branch
      %116 = sbr.rel (%p113) target = $region28
    $region27: #{integral_forward.1} parent=5 // pred_region
      %s117 = ssub.s32 %s8, 1
      %p118 = pneg %p29
      %p119 = pneg %p26
      %p120 = scmp.lt.s32.totalorder %s13, 1
      %s121 = scalar_select %p120, %s13, 1
      %s122 = smul.addr %s121, 8
      %s123 = smul.addr %s122, 8
      %s124 = scalar_lea.vmem %s1, %s123
      %p125 = pneg %p55
      %p126 = pneg %p52
      %p127 = pneg %p81
      %p128 = pneg %p78
      %p129 = scmp.lt.s32.totalorder %s13, 1
      %s130 = scalar_select %p129, %s13, 1
      %s131 = smul.addr %s130, 8
      %s132 = scalar_lea.vmem %s2, %s131
      %p133 = scmp.lt.s32.totalorder %s13, 1
      %s134 = scalar_select %p133, %s13, 1
      %s135 = smul.addr %s134, 8
      %s136 = smul.addr %s135, 8
      %s137 = scalar_lea.vmem %s1, %s136
      %p138 = scmp.lt.s32.totalorder %s13, 1
      %s139 = scalar_select %p138, %s13, 1
      %s140 = smul.addr %s139, 8
      %s141 = scalar_lea.vmem %s2, %s140
      %v142 = vld [vmem:[%s137] sm:$0xff]
      %v143 = vld [vmem:[%s137 + $0x8] sm:$0xff]
      %v144 = vld [vmem:[%s137 + $0x10] sm:$0xff]
      %v145 = vld [vmem:[%s137 + $0x18] sm:$0xff]
      %v146 = vld [vmem:[%s137 + $0x20] sm:$0xff]
      %v147 = vld [vmem:[%s137 + $0x28] sm:$0xff]
      %v148 = vld [vmem:[%s137 + $0x30] sm:$0xff]
      %v149 = vld [vmem:[%s137 + $0x38] sm:$0xff]
      %v150 = vmax.f32 %v142, %v146
      %v151 = vmax.f32 %v143, %v147
      %v152 = vmax.f32 %v144, %v148
      %v153 = vmax.f32 %v145, %v149
      %v154 = vmax.f32 %v150, %v151
      %v155 = vmax.f32 %v152, %v153
      %v156 = vmax.f32 %v154, %v155
      %157 = vmax.xlane.f32.xlu0 %v156
      %v158 = vpop.xlane.xlu0 %157
      %v159 = vsub.f32 %v142, %v158
      %v160 = vsub.f32 %v143, %v158
      %v161 = vsub.f32 %v144, %v158
      %v162 = vsub.f32 %v145, %v158
      %v163 = vsub.f32 %v146, %v158
      %v164 = vsub.f32 %v147, %v158
      %v165 = vsub.f32 %v148, %v158
      %v166 = vsub.f32 %v149, %v158
      %v167 = vmul.f32 %v159, 1.442695
      %v168 = vpow.pop %v167
      %v169 = vmul.f32 %v160, 1.442695
      %v170 = vpow.pop %v169
      %v171 = vmul.f32 %v161, 1.442695
      %v172 = vpow.pop %v171
      %v173 = vmul.f32 %v162, 1.442695
      %v174 = vpow.pop %v173
      %v175 = vmul.f32 %v163, 1.442695
      %v176 = vpow.pop %v175
      %v177 = vmul.f32 %v164, 1.442695
      %v178 = vpow.pop %v177
      %v179 = vmul.f32 %v165, 1.442695
      %v180 = vpow.pop %v179
      %v181 = vmul.f32 %v166, 1.442695
      %v182 = vpow.pop %v181
      %v183 = vld [vmem:[%s0] sm:$0xff]
      %v184 = vld [vmem:[%s0 + $0x8] sm:$0xff]
      %v185 = vld [vmem:[%s0 + $0x10] sm:$0xff]
      %v186 = vld [vmem:[%s0 + $0x18] sm:$0xff]
      %v187 = vld [vmem:[%s0 + $0x20] sm:$0xff]
      %v188 = vld [vmem:[%s0 + $0x28] sm:$0xff]
      %v189 = vld [vmem:[%s0 + $0x30] sm:$0xff]
      %v190 = vld [vmem:[%s0 + $0x38] sm:$0xff]
      %v191 = vld [vmem:[%s0 + $0x40] sm:$0xff]
      %v192 = vld [vmem:[%s0 + $0x48] sm:$0xff]
      %v193 = vld [vmem:[%s0 + $0x50] sm:$0xff]
      %v194 = vld [vmem:[%s0 + $0x58] sm:$0xff]
      %v195 = vld [vmem:[%s0 + $0x60] sm:$0xff]
      %v196 = vld [vmem:[%s0 + $0x68] sm:$0xff]
      %v197 = vld [vmem:[%s0 + $0x70] sm:$0xff]
      %v198 = vld [vmem:[%s0 + $0x78] sm:$0xff]
      %v199 = vld [vmem:[%s0 + $0x80] sm:$0xff]
      %v200 = vld [vmem:[%s0 + $0x88] sm:$0xff]
      %v201 = vld [vmem:[%s0 + $0x90] sm:$0xff]
      %v202 = vld [vmem:[%s0 + $0x98] sm:$0xff]
      %v203 = vld [vmem:[%s0 + $0xa0] sm:$0xff]
      %v204 = vld [vmem:[%s0 + $0xa8] sm:$0xff]
      %v205 = vld [vmem:[%s0 + $0xb0] sm:$0xff]
      %v206 = vld [vmem:[%s0 + $0xb8] sm:$0xff]
      %v207 = vld [vmem:[%s0 + $0xc0] sm:$0xff]
      %v208 = vld [vmem:[%s0 + $0xc8] sm:$0xff]
      %v209 = vld [vmem:[%s0 + $0xd0] sm:$0xff]
      %v210 = vld [vmem:[%s0 + $0xd8] sm:$0xff]
      %v211 = vld [vmem:[%s0 + $0xe0] sm:$0xff]
      %v212 = vld [vmem:[%s0 + $0xe8] sm:$0xff]
      %v213 = vld [vmem:[%s0 + $0xf0] sm:$0xff]
      %v214 = vld [vmem:[%s0 + $0xf8] sm:$0xff]
      %v215 = vld [vmem:[%s0 + $0x100] sm:$0xff]
      %v216 = vld [vmem:[%s0 + $0x108] sm:$0xff]
      %v217 = vld [vmem:[%s0 + $0x110] sm:$0xff]
      %v218 = vld [vmem:[%s0 + $0x118] sm:$0xff]
      %v219 = vld [vmem:[%s0 + $0x120] sm:$0xff]
      %v220 = vld [vmem:[%s0 + $0x128] sm:$0xff]
      %v221 = vld [vmem:[%s0 + $0x130] sm:$0xff]
      %v222 = vld [vmem:[%s0 + $0x138] sm:$0xff]
      %v223 = vld [vmem:[%s0 + $0x140] sm:$0xff]
      %v224 = vld [vmem:[%s0 + $0x148] sm:$0xff]
      %v225 = vld [vmem:[%s0 + $0x150] sm:$0xff]
      %v226 = vld [vmem:[%s0 + $0x158] sm:$0xff]
      %v227 = vld [vmem:[%s0 + $0x160] sm:$0xff]
      %v228 = vld [vmem:[%s0 + $0x168] sm:$0xff]
      %v229 = vld [vmem:[%s0 + $0x170] sm:$0xff]
      %v230 = vld [vmem:[%s0 + $0x178] sm:$0xff]
      %v231 = vld [vmem:[%s0 + $0x180] sm:$0xff]
      %v232 = vld [vmem:[%s0 + $0x188] sm:$0xff]
      %v233 = vld [vmem:[%s0 + $0x190] sm:$0xff]
      %v234 = vld [vmem:[%s0 + $0x198] sm:$0xff]
      %v235 = vld [vmem:[%s0 + $0x1a0] sm:$0xff]
      %v236 = vld [vmem:[%s0 + $0x1a8] sm:$0xff]
      %v237 = vld [vmem:[%s0 + $0x1b0] sm:$0xff]
      %v238 = vld [vmem:[%s0 + $0x1b8] sm:$0xff]
      %v239 = vld [vmem:[%s0 + $0x1c0] sm:$0xff]
      %v240 = vld [vmem:[%s0 + $0x1c8] sm:$0xff]
      %v241 = vld [vmem:[%s0 + $0x1d0] sm:$0xff]
      %v242 = vld [vmem:[%s0 + $0x1d8] sm:$0xff]
      %v243 = vld [vmem:[%s0 + $0x1e0] sm:$0xff]
      %v244 = vld [vmem:[%s0 + $0x1e8] sm:$0xff]
      %v245 = vld [vmem:[%s0 + $0x1f0] sm:$0xff]
      %v246 = vld [vmem:[%s0 + $0x1f8] sm:$0xff]
      %v247 = vld [vmem:[%s0 + $0x200] sm:$0xff]
      %v248 = vld [vmem:[%s0 + $0x208] sm:$0xff]
      %v249 = vld [vmem:[%s0 + $0x210] sm:$0xff]
      %v250 = vld [vmem:[%s0 + $0x218] sm:$0xff]
      %v251 = vld [vmem:[%s0 + $0x220] sm:$0xff]
      %v252 = vld [vmem:[%s0 + $0x228] sm:$0xff]
      %v253 = vld [vmem:[%s0 + $0x230] sm:$0xff]
      %v254 = vld [vmem:[%s0 + $0x238] sm:$0xff]
      %v255 = vld [vmem:[%s0 + $0x240] sm:$0xff]
      %v256 = vld [vmem:[%s0 + $0x248] sm:$0xff]
      %v257 = vld [vmem:[%s0 + $0x250] sm:$0xff]
      %v258 = vld [vmem:[%s0 + $0x258] sm:$0xff]
      %v259 = vld [vmem:[%s0 + $0x260] sm:$0xff]
      %v260 = vld [vmem:[%s0 + $0x268] sm:$0xff]
      %v261 = vld [vmem:[%s0 + $0x270] sm:$0xff]
      %v262 = vld [vmem:[%s0 + $0x278] sm:$0xff]
      %v263 = vld [vmem:[%s0 + $0x280] sm:$0xff]
      %v264 = vld [vmem:[%s0 + $0x288] sm:$0xff]
      %v265 = vld [vmem:[%s0 + $0x290] sm:$0xff]
      %v266 = vld [vmem:[%s0 + $0x298] sm:$0xff]
      %v267 = vld [vmem:[%s0 + $0x2a0] sm:$0xff]
      %v268 = vld [vmem:[%s0 + $0x2a8] sm:$0xff]
      %v269 = vld [vmem:[%s0 + $0x2b0] sm:$0xff]
      %v270 = vld [vmem:[%s0 + $0x2b8] sm:$0xff]
      %v271 = vld [vmem:[%s0 + $0x2c0] sm:$0xff]
      %v272 = vld [vmem:[%s0 + $0x2c8] sm:$0xff]
      %v273 = vld [vmem:[%s0 + $0x2d0] sm:$0xff]
      %v274 = vld [vmem:[%s0 + $0x2d8] sm:$0xff]
      %v275 = vld [vmem:[%s0 + $0x2e0] sm:$0xff]
      %v276 = vld [vmem:[%s0 + $0x2e8] sm:$0xff]
      %v277 = vld [vmem:[%s0 + $0x2f0] sm:$0xff]
      %v278 = vld [vmem:[%s0 + $0x2f8] sm:$0xff]
      %v279 = vld [vmem:[%s0 + $0x300] sm:$0xff]
      %v280 = vld [vmem:[%s0 + $0x308] sm:$0xff]
      %v281 = vld [vmem:[%s0 + $0x310] sm:$0xff]
      %v282 = vld [vmem:[%s0 + $0x318] sm:$0xff]
      %v283 = vld [vmem:[%s0 + $0x320] sm:$0xff]
      %v284 = vld [vmem:[%s0 + $0x328] sm:$0xff]
      %v285 = vld [vmem:[%s0 + $0x330] sm:$0xff]
      %v286 = vld [vmem:[%s0 + $0x338] sm:$0xff]
      %v287 = vld [vmem:[%s0 + $0x340] sm:$0xff]
      %v288 = vld [vmem:[%s0 + $0x348] sm:$0xff]
      %v289 = vld [vmem:[%s0 + $0x350] sm:$0xff]
      %v290 = vld [vmem:[%s0 + $0x358] sm:$0xff]
      %v291 = vld [vmem:[%s0 + $0x360] sm:$0xff]
      %v292 = vld [vmem:[%s0 + $0x368] sm:$0xff]
      %v293 = vld [vmem:[%s0 + $0x370] sm:$0xff]
      %v294 = vld [vmem:[%s0 + $0x378] sm:$0xff]
      %v295 = vld [vmem:[%s0 + $0x380] sm:$0xff]
      %v296 = vld [vmem:[%s0 + $0x388] sm:$0xff]
      %v297 = vld [vmem:[%s0 + $0x390] sm:$0xff]
      %v298 = vld [vmem:[%s0 + $0x398] sm:$0xff]
      %v299 = vld [vmem:[%s0 + $0x3a0] sm:$0xff]
      %v300 = vld [vmem:[%s0 + $0x3a8] sm:$0xff]
      %v301 = vld [vmem:[%s0 + $0x3b0] sm:$0xff]
      %v302 = vld [vmem:[%s0 + $0x3b8] sm:$0xff]
      %v303 = vld [vmem:[%s0 + $0x3c0] sm:$0xff]
      %v304 = vld [vmem:[%s0 + $0x3c8] sm:$0xff]
      %v305 = vld [vmem:[%s0 + $0x3d0] sm:$0xff]
      %v306 = vld [vmem:[%s0 + $0x3d8] sm:$0xff]
      %v307 = vld [vmem:[%s0 + $0x3e0] sm:$0xff]
      %v308 = vld [vmem:[%s0 + $0x3e8] sm:$0xff]
      %v309 = vld [vmem:[%s0 + $0x3f0] sm:$0xff]
      %v310 = vld [vmem:[%s0 + $0x3f8] sm:$0xff]
      %v311 = vld [vmem:[%s0 + $0x400] sm:$0xff]
      %v312 = vld [vmem:[%s0 + $0x408] sm:$0xff]
      %v313 = vld [vmem:[%s0 + $0x410] sm:$0xff]
      %v314 = vld [vmem:[%s0 + $0x418] sm:$0xff]
      %v315 = vld [vmem:[%s0 + $0x420] sm:$0xff]
      %v316 = vld [vmem:[%s0 + $0x428] sm:$0xff]
      %v317 = vld [vmem:[%s0 + $0x430] sm:$0xff]
      %v318 = vld [vmem:[%s0 + $0x438] sm:$0xff]
      %v319 = vld [vmem:[%s0 + $0x440] sm:$0xff]
      %v320 = vld [vmem:[%s0 + $0x448] sm:$0xff]
      %v321 = vld [vmem:[%s0 + $0x450] sm:$0xff]
      %v322 = vld [vmem:[%s0 + $0x458] sm:$0xff]
      %v323 = vld [vmem:[%s0 + $0x460] sm:$0xff]
      %v324 = vld [vmem:[%s0 + $0x468] sm:$0xff]
      %v325 = vld [vmem:[%s0 + $0x470] sm:$0xff]
      %v326 = vld [vmem:[%s0 + $0x478] sm:$0xff]
      %v327 = vld [vmem:[%s0 + $0x480] sm:$0xff]
      %v328 = vld [vmem:[%s0 + $0x488] sm:$0xff]
      %v329 = vld [vmem:[%s0 + $0x490] sm:$0xff]
      %v330 = vld [vmem:[%s0 + $0x498] sm:$0xff]
      %v331 = vld [vmem:[%s0 + $0x4a0] sm:$0xff]
      %v332 = vld [vmem:[%s0 + $0x4a8] sm:$0xff]
      %v333 = vld [vmem:[%s0 + $0x4b0] sm:$0xff]
      %v334 = vld [vmem:[%s0 + $0x4b8] sm:$0xff]
      %v335 = vld [vmem:[%s0 + $0x4c0] sm:$0xff]
      %v336 = vld [vmem:[%s0 + $0x4c8] sm:$0xff]
      %v337 = vld [vmem:[%s0 + $0x4d0] sm:$0xff]
      %v338 = vld [vmem:[%s0 + $0x4d8] sm:$0xff]
      %v339 = vld [vmem:[%s0 + $0x4e0] sm:$0xff]
      %v340 = vld [vmem:[%s0 + $0x4e8] sm:$0xff]
      %v341 = vld [vmem:[%s0 + $0x4f0] sm:$0xff]
      %v342 = vld [vmem:[%s0 + $0x4f8] sm:$0xff]
      %v343 = vld [vmem:[%s0 + $0x500] sm:$0xff]
      %v344 = vld [vmem:[%s0 + $0x508] sm:$0xff]
      %v345 = vld [vmem:[%s0 + $0x510] sm:$0xff]
      %v346 = vld [vmem:[%s0 + $0x518] sm:$0xff]
      %v347 = vld [vmem:[%s0 + $0x520] sm:$0xff]
      %v348 = vld [vmem:[%s0 + $0x528] sm:$0xff]
      %v349 = vld [vmem:[%s0 + $0x530] sm:$0xff]
      %v350 = vld [vmem:[%s0 + $0x538] sm:$0xff]
      %v351 = vld [vmem:[%s0 + $0x540] sm:$0xff]
      %v352 = vld [vmem:[%s0 + $0x548] sm:$0xff]
      %v353 = vld [vmem:[%s0 + $0x550] sm:$0xff]
      %v354 = vld [vmem:[%s0 + $0x558] sm:$0xff]
      %v355 = vld [vmem:[%s0 + $0x560] sm:$0xff]
      %v356 = vld [vmem:[%s0 + $0x568] sm:$0xff]
      %v357 = vld [vmem:[%s0 + $0x570] sm:$0xff]
      %v358 = vld [vmem:[%s0 + $0x578] sm:$0xff]
      %v359 = vld [vmem:[%s0 + $0x580] sm:$0xff]
      %v360 = vld [vmem:[%s0 + $0x588] sm:$0xff]
      %v361 = vld [vmem:[%s0 + $0x590] sm:$0xff]
      %v362 = vld [vmem:[%s0 + $0x598] sm:$0xff]
      %v363 = vld [vmem:[%s0 + $0x5a0] sm:$0xff]
      %v364 = vld [vmem:[%s0 + $0x5a8] sm:$0xff]
      %v365 = vld [vmem:[%s0 + $0x5b0] sm:$0xff]
      %v366 = vld [vmem:[%s0 + $0x5b8] sm:$0xff]
      %v367 = vld [vmem:[%s0 + $0x5c0] sm:$0xff]
      %v368 = vld [vmem:[%s0 + $0x5c8] sm:$0xff]
      %v369 = vld [vmem:[%s0 + $0x5d0] sm:$0xff]
      %v370 = vld [vmem:[%s0 + $0x5d8] sm:$0xff]
      %v371 = vld [vmem:[%s0 + $0x5e0] sm:$0xff]
      %v372 = vld [vmem:[%s0 + $0x5e8] sm:$0xff]
      %v373 = vld [vmem:[%s0 + $0x5f0] sm:$0xff]
      %v374 = vld [vmem:[%s0 + $0x5f8] sm:$0xff]
      %v375 = vld [vmem:[%s0 + $0x600] sm:$0xff]
      %v376 = vld [vmem:[%s0 + $0x608] sm:$0xff]
      %v377 = vld [vmem:[%s0 + $0x610] sm:$0xff]
      %v378 = vld [vmem:[%s0 + $0x618] sm:$0xff]
      %v379 = vld [vmem:[%s0 + $0x620] sm:$0xff]
      %v380 = vld [vmem:[%s0 + $0x628] sm:$0xff]
      %v381 = vld [vmem:[%s0 + $0x630] sm:$0xff]
      %v382 = vld [vmem:[%s0 + $0x638] sm:$0xff]
      %v383 = vld [vmem:[%s0 + $0x640] sm:$0xff]
      %v384 = vld [vmem:[%s0 + $0x648] sm:$0xff]
      %v385 = vld [vmem:[%s0 + $0x650] sm:$0xff]
      %v386 = vld [vmem:[%s0 + $0x658] sm:$0xff]
      %v387 = vld [vmem:[%s0 + $0x660] sm:$0xff]
      %v388 = vld [vmem:[%s0 + $0x668] sm:$0xff]
      %v389 = vld [vmem:[%s0 + $0x670] sm:$0xff]
      %v390 = vld [vmem:[%s0 + $0x678] sm:$0xff]
      %v391 = vld [vmem:[%s0 + $0x680] sm:$0xff]
      %v392 = vld [vmem:[%s0 + $0x688] sm:$0xff]
      %v393 = vld [vmem:[%s0 + $0x690] sm:$0xff]
      %v394 = vld [vmem:[%s0 + $0x698] sm:$0xff]
      %v395 = vld [vmem:[%s0 + $0x6a0] sm:$0xff]
      %v396 = vld [vmem:[%s0 + $0x6a8] sm:$0xff]
      %v397 = vld [vmem:[%s0 + $0x6b0] sm:$0xff]
      %v398 = vld [vmem:[%s0 + $0x6b8] sm:$0xff]
      %v399 = vld [vmem:[%s0 + $0x6c0] sm:$0xff]
      %v400 = vld [vmem:[%s0 + $0x6c8] sm:$0xff]
      %v401 = vld [vmem:[%s0 + $0x6d0] sm:$0xff]
      %v402 = vld [vmem:[%s0 + $0x6d8] sm:$0xff]
      %v403 = vld [vmem:[%s0 + $0x6e0] sm:$0xff]
      %v404 = vld [vmem:[%s0 + $0x6e8] sm:$0xff]
      %v405 = vld [vmem:[%s0 + $0x6f0] sm:$0xff]
      %v406 = vld [vmem:[%s0 + $0x6f8] sm:$0xff]
      %v407 = vld [vmem:[%s0 + $0x700] sm:$0xff]
      %v408 = vld [vmem:[%s0 + $0x708] sm:$0xff]
      %v409 = vld [vmem:[%s0 + $0x710] sm:$0xff]
      %v410 = vld [vmem:[%s0 + $0x718] sm:$0xff]
      %v411 = vld [vmem:[%s0 + $0x720] sm:$0xff]
      %v412 = vld [vmem:[%s0 + $0x728] sm:$0xff]
      %v413 = vld [vmem:[%s0 + $0x730] sm:$0xff]
      %v414 = vld [vmem:[%s0 + $0x738] sm:$0xff]
      %v415 = vld [vmem:[%s0 + $0x740] sm:$0xff]
      %v416 = vld [vmem:[%s0 + $0x748] sm:$0xff]
      %v417 = vld [vmem:[%s0 + $0x750] sm:$0xff]
      %v418 = vld [vmem:[%s0 + $0x758] sm:$0xff]
      %v419 = vld [vmem:[%s0 + $0x760] sm:$0xff]
      %v420 = vld [vmem:[%s0 + $0x768] sm:$0xff]
      %v421 = vld [vmem:[%s0 + $0x770] sm:$0xff]
      %v422 = vld [vmem:[%s0 + $0x778] sm:$0xff]
      %v423 = vld [vmem:[%s0 + $0x780] sm:$0xff]
      %v424 = vld [vmem:[%s0 + $0x788] sm:$0xff]
      %v425 = vld [vmem:[%s0 + $0x790] sm:$0xff]
      %v426 = vld [vmem:[%s0 + $0x798] sm:$0xff]
      %v427 = vld [vmem:[%s0 + $0x7a0] sm:$0xff]
      %v428 = vld [vmem:[%s0 + $0x7a8] sm:$0xff]
      %v429 = vld [vmem:[%s0 + $0x7b0] sm:$0xff]
      %v430 = vld [vmem:[%s0 + $0x7b8] sm:$0xff]
      %v431 = vld [vmem:[%s0 + $0x7c0] sm:$0xff]
      %v432 = vld [vmem:[%s0 + $0x7c8] sm:$0xff]
      %v433 = vld [vmem:[%s0 + $0x7d0] sm:$0xff]
      %v434 = vld [vmem:[%s0 + $0x7d8] sm:$0xff]
      %v435 = vld [vmem:[%s0 + $0x7e0] sm:$0xff]
      %v436 = vld [vmem:[%s0 + $0x7e8] sm:$0xff]
      %v437 = vld [vmem:[%s0 + $0x7f0] sm:$0xff]
      %v438 = vld [vmem:[%s0 + $0x7f8] sm:$0xff]
      %439 = vmatprep.subr.mxu0 %v184
      %440 = vmatpush1.msra.mxu0 %v183
      %441 = vmatprep.subr.mxu0 %v186
      %442 = vmatpush1.msra.mxu0 %v185
      %443 = vmatprep.subr.mxu0 %v188
      %444 = vmatpush1.msra.mxu0 %v187
      %445 = vmatprep.subr.mxu0 %v190
      %446 = vmatpush1.msra.mxu0 %v189
      %447 = vmatprep.subr.mxu0 %v192
      %448 = vmatpush1.msra.mxu0 %v191
      %449 = vmatprep.subr.mxu0 %v194
      %450 = vmatpush1.msra.mxu0 %v193
      %451 = vmatprep.subr.mxu0 %v196
      %452 = vmatpush1.msra.mxu0 %v195
      %453 = vmatprep.subr.mxu0 %v198
      %454 = vmatpush1.msra.mxu0 %v197
      %455 = vmatprep.subr.mxu0 %v200
      %456 = vmatpush1.msra.mxu0 %v199
      %457 = vmatprep.subr.mxu0 %v202
      %458 = vmatpush1.msra.mxu0 %v201
      %459 = vmatprep.subr.mxu0 %v204
      %460 = vmatpush1.msra.mxu0 %v203
      %461 = vmatprep.subr.mxu0 %v206
      %462 = vmatpush1.msra.mxu0 %v205
      %463 = vmatprep.subr.mxu0 %v208
      %464 = vmatpush1.msra.mxu0 %v207
      %465 = vmatprep.subr.mxu0 %v210
      %466 = vmatpush1.msra.mxu0 %v209
      %467 = vmatprep.subr.mxu0 %v212
      %468 = vmatpush1.msra.mxu0 %v211
      %469 = vmatprep.subr.mxu0 %v214
      %470 = vmatpush1.msra.mxu0 %v213
      %471 = vmatprep.subr.mxu0 %v216
      %472 = vmatpush1.msra.mxu0 %v215
      %473 = vmatprep.subr.mxu0 %v218
      %474 = vmatpush1.msra.mxu0 %v217
      %475 = vmatprep.subr.mxu0 %v220
      %476 = vmatpush1.msra.mxu0 %v219
      %477 = vmatprep.subr.mxu0 %v222
      %478 = vmatpush1.msra.mxu0 %v221
      %479 = vmatprep.subr.mxu0 %v224
      %480 = vmatpush1.msra.mxu0 %v223
      %481 = vmatprep.subr.mxu0 %v226
      %482 = vmatpush1.msra.mxu0 %v225
      %483 = vmatprep.subr.mxu0 %v228
      %484 = vmatpush1.msra.mxu0 %v227
      %485 = vmatprep.subr.mxu0 %v230
      %486 = vmatpush1.msra.mxu0 %v229
      %487 = vmatprep.subr.mxu0 %v232
      %488 = vmatpush1.msra.mxu0 %v231
      %489 = vmatprep.subr.mxu0 %v234
      %490 = vmatpush1.msra.mxu0 %v233
      %491 = vmatprep.subr.mxu0 %v236
      %492 = vmatpush1.msra.mxu0 %v235
      %493 = vmatprep.subr.mxu0 %v238
      %494 = vmatpush1.msra.mxu0 %v237
      %495 = vmatprep.subr.mxu0 %v240
      %496 = vmatpush1.msra.mxu0 %v239
      %497 = vmatprep.subr.mxu0 %v242
      %498 = vmatpush1.msra.mxu0 %v241
      %499 = vmatprep.subr.mxu0 %v244
      %500 = vmatpush1.msra.mxu0 %v243
      %501 = vmatprep.subr.mxu0 %v246
      %502 = vmatpush1.msra.mxu0 %v245
      %503 = vmatprep.mubr.f32.mxu0 %v170
      %504 = vmatmul.mubr.f32.gmra.mrb[0].mxu0 %v168
      %v505 = vpop.f32.mrb[0].mxu0
      %v506 = vadd.f32 0.0, %v505
      %v507 = vpop.f32.mrb[0].mxu0
      %v508 = vadd.f32 0.0, %v507
      %509 = vdwg.mxu0
      %510 = vmatprep.subr.mxu0 %v248
      %511 = vmatpush1.msra.mxu0 %v247
      %512 = vmatprep.subr.mxu0 %v250
      %513 = vmatpush1.msra.mxu0 %v249
      %514 = vmatprep.subr.mxu0 %v252
      %515 = vmatpush1.msra.mxu0 %v251
      %516 = vmatprep.subr.mxu0 %v254
      %517 = vmatpush1.msra.mxu0 %v253
      %518 = vmatprep.subr.mxu0 %v256
      %519 = vmatpush1.msra.mxu0 %v255
      %520 = vmatprep.subr.mxu0 %v258
      %521 = vmatpush1.msra.mxu0 %v257
      %522 = vmatprep.subr.mxu0 %v260
      %523 = vmatpush1.msra.mxu0 %v259
      %524 = vmatprep.subr.mxu0 %v262
      %525 = vmatpush1.msra.mxu0 %v261
      %526 = vmatprep.subr.mxu0 %v264
      %527 = vmatpush1.msra.mxu0 %v263
      %528 = vmatprep.subr.mxu0 %v266
      %529 = vmatpush1.msra.mxu0 %v265
      %530 = vmatprep.subr.mxu0 %v268
      %531 = vmatpush1.msra.mxu0 %v267
      %532 = vmatprep.subr.mxu0 %v270
      %533 = vmatpush1.msra.mxu0 %v269
      %534 = vmatprep.subr.mxu0 %v272
      %535 = vmatpush1.msra.mxu0 %v271
      %536 = vmatprep.subr.mxu0 %v274
      %537 = vmatpush1.msra.mxu0 %v273
      %538 = vmatprep.subr.mxu0 %v276
      %539 = vmatpush1.msra.mxu0 %v275
      %540 = vmatprep.subr.mxu0 %v278
      %541 = vmatpush1.msra.mxu0 %v277
      %542 = vmatprep.subr.mxu0 %v280
      %543 = vmatpush1.msra.mxu0 %v279
      %544 = vmatprep.subr.mxu0 %v282
      %545 = vmatpush1.msra.mxu0 %v281
      %546 = vmatprep.subr.mxu0 %v284
      %547 = vmatpush1.msra.mxu0 %v283
      %548 = vmatprep.subr.mxu0 %v286
      %549 = vmatpush1.msra.mxu0 %v285
      %550 = vmatprep.subr.mxu0 %v288
      %551 = vmatpush1.msra.mxu0 %v287
      %552 = vmatprep.subr.mxu0 %v290
      %553 = vmatpush1.msra.mxu0 %v289
      %554 = vmatprep.subr.mxu0 %v292
      %555 = vmatpush1.msra.mxu0 %v291
      %556 = vmatprep.subr.mxu0 %v294
      %557 = vmatpush1.msra.mxu0 %v293
      %558 = vmatprep.subr.mxu0 %v296
      %559 = vmatpush1.msra.mxu0 %v295
      %560 = vmatprep.subr.mxu0 %v298
      %561 = vmatpush1.msra.mxu0 %v297
      %562 = vmatprep.subr.mxu0 %v300
      %563 = vmatpush1.msra.mxu0 %v299
      %564 = vmatprep.subr.mxu0 %v302
      %565 = vmatpush1.msra.mxu0 %v301
      %566 = vmatprep.subr.mxu0 %v304
      %567 = vmatpush1.msra.mxu0 %v303
      %568 = vmatprep.subr.mxu0 %v306
      %569 = vmatpush1.msra.mxu0 %v305
      %570 = vmatprep.subr.mxu0 %v308
      %571 = vmatpush1.msra.mxu0 %v307
      %572 = vmatprep.subr.mxu0 %v310
      %573 = vmatpush1.msra.mxu0 %v309
      %574 = vmatprep.mubr.f32.mxu0 %v174
      %575 = vmatmul.mubr.f32.gmra.mrb[0].mxu0 %v172
      %v576 = vpop.f32.mrb[0].mxu0
      %v577 = vadd.f32 %v506, %v576
      %v578 = vpop.f32.mrb[0].mxu0
      %v579 = vadd.f32 %v508, %v578
      %580 = vdwg.mxu0
      %581 = vmatprep.subr.mxu0 %v312
      %582 = vmatpush1.msra.mxu0 %v311
      %583 = vmatprep.subr.mxu0 %v314
      %584 = vmatpush1.msra.mxu0 %v313
      %585 = vmatprep.subr.mxu0 %v316
      %586 = vmatpush1.msra.mxu0 %v315
      %587 = vmatprep.subr.mxu0 %v318
      %588 = vmatpush1.msra.mxu0 %v317
      %589 = vmatprep.subr.mxu0 %v320
      %590 = vmatpush1.msra.mxu0 %v319
      %591 = vmatprep.subr.mxu0 %v322
      %592 = vmatpush1.msra.mxu0 %v321
      %593 = vmatprep.subr.mxu0 %v324
      %594 = vmatpush1.msra.mxu0 %v323
      %595 = vmatprep.subr.mxu0 %v326
      %596 = vmatpush1.msra.mxu0 %v325
      %597 = vmatprep.subr.mxu0 %v328
      %598 = vmatpush1.msra.mxu0 %v327
      %599 = vmatprep.subr.mxu0 %v330
      %600 = vmatpush1.msra.mxu0 %v329
      %601 = vmatprep.subr.mxu0 %v332
      %602 = vmatpush1.msra.mxu0 %v331
      %603 = vmatprep.subr.mxu0 %v334
      %604 = vmatpush1.msra.mxu0 %v333
      %605 = vmatprep.subr.mxu0 %v336
      %606 = vmatpush1.msra.mxu0 %v335
      %607 = vmatprep.subr.mxu0 %v338
      %608 = vmatpush1.msra.mxu0 %v337
      %609 = vmatprep.subr.mxu0 %v340
      %610 = vmatpush1.msra.mxu0 %v339
      %611 = vmatprep.subr.mxu0 %v342
      %612 = vmatpush1.msra.mxu0 %v341
      %613 = vmatprep.subr.mxu0 %v344
      %614 = vmatpush1.msra.mxu0 %v343
      %615 = vmatprep.subr.mxu0 %v346
      %616 = vmatpush1.msra.mxu0 %v345
      %617 = vmatprep.subr.mxu0 %v348
      %618 = vmatpush1.msra.mxu0 %v347
      %619 = vmatprep.subr.mxu0 %v350
      %620 = vmatpush1.msra.mxu0 %v349
      %621 = vmatprep.subr.mxu0 %v352
      %622 = vmatpush1.msra.mxu0 %v351
      %623 = vmatprep.subr.mxu0 %v354
      %624 = vmatpush1.msra.mxu0 %v353
      %625 = vmatprep.subr.mxu0 %v356
      %626 = vmatpush1.msra.mxu0 %v355
      %627 = vmatprep.subr.mxu0 %v358
      %628 = vmatpush1.msra.mxu0 %v357
      %629 = vmatprep.subr.mxu0 %v360
      %630 = vmatpush1.msra.mxu0 %v359
      %631 = vmatprep.subr.mxu0 %v362
      %632 = vmatpush1.msra.mxu0 %v361
      %633 = vmatprep.subr.mxu0 %v364
      %634 = vmatpush1.msra.mxu0 %v363
      %635 = vmatprep.subr.mxu0 %v366
      %636 = vmatpush1.msra.mxu0 %v365
      %637 = vmatprep.subr.mxu0 %v368
      %638 = vmatpush1.msra.mxu0 %v367
      %639 = vmatprep.subr.mxu0 %v370
      %640 = vmatpush1.msra.mxu0 %v369
      %641 = vmatprep.subr.mxu0 %v372
      %642 = vmatpush1.msra.mxu0 %v371
      %643 = vmatprep.subr.mxu0 %v374
      %644 = vmatpush1.msra.mxu0 %v373
      %645 = vmatprep.mubr.f32.mxu0 %v178
      %646 = vmatmul.mubr.f32.gmra.mrb[0].mxu0 %v176
      %v647 = vpop.f32.mrb[0].mxu0
      %v648 = vadd.f32 %v577, %v647
      %v649 = vpop.f32.mrb[0].mxu0
      %v650 = vadd.f32 %v579, %v649
      %651 = vdwg.mxu0
      %652 = vmatprep.subr.mxu0 %v376
      %653 = vmatpush1.msra.mxu0 %v375
      %654 = vmatprep.subr.mxu0 %v378
      %655 = vmatpush1.msra.mxu0 %v377
      %656 = vmatprep.subr.mxu0 %v380
      %657 = vmatpush1.msra.mxu0 %v379
      %658 = vmatprep.subr.mxu0 %v382
      %659 = vmatpush1.msra.mxu0 %v381
      %660 = vmatprep.subr.mxu0 %v384
      %661 = vmatpush1.msra.mxu0 %v383
      %662 = vmatprep.subr.mxu0 %v386
      %663 = vmatpush1.msra.mxu0 %v385
      %664 = vmatprep.subr.mxu0 %v388
      %665 = vmatpush1.msra.mxu0 %v387
      %666 = vmatprep.subr.mxu0 %v390
      %667 = vmatpush1.msra.mxu0 %v389
      %668 = vmatprep.subr.mxu0 %v392
      %669 = vmatpush1.msra.mxu0 %v391
      %670 = vmatprep.subr.mxu0 %v394
      %671 = vmatpush1.msra.mxu0 %v393
      %672 = vmatprep.subr.mxu0 %v396
      %673 = vmatpush1.msra.mxu0 %v395
      %674 = vmatprep.subr.mxu0 %v398
      %675 = vmatpush1.msra.mxu0 %v397
      %676 = vmatprep.subr.mxu0 %v400
      %677 = vmatpush1.msra.mxu0 %v399
      %678 = vmatprep.subr.mxu0 %v402
      %679 = vmatpush1.msra.mxu0 %v401
      %680 = vmatprep.subr.mxu0 %v404
      %681 = vmatpush1.msra.mxu0 %v403
      %682 = vmatprep.subr.mxu0 %v406
      %683 = vmatpush1.msra.mxu0 %v405
      %684 = vmatprep.subr.mxu0 %v408
      %685 = vmatpush1.msra.mxu0 %v407
      %686 = vmatprep.subr.mxu0 %v410
      %687 = vmatpush1.msra.mxu0 %v409
      %688 = vmatprep.subr.mxu0 %v412
      %689 = vmatpush1.msra.mxu0 %v411
      %690 = vmatprep.subr.mxu0 %v414
      %691 = vmatpush1.msra.mxu0 %v413
      %692 = vmatprep.subr.mxu0 %v416
      %693 = vmatpush1.msra.mxu0 %v415
      %694 = vmatprep.subr.mxu0 %v418
      %695 = vmatpush1.msra.mxu0 %v417
      %696 = vmatprep.subr.mxu0 %v420
      %697 = vmatpush1.msra.mxu0 %v419
      %698 = vmatprep.subr.mxu0 %v422
      %699 = vmatpush1.msra.mxu0 %v421
      %700 = vmatprep.subr.mxu0 %v424
      %701 = vmatpush1.msra.mxu0 %v423
      %702 = vmatprep.subr.mxu0 %v426
      %703 = vmatpush1.msra.mxu0 %v425
      %704 = vmatprep.subr.mxu0 %v428
      %705 = vmatpush1.msra.mxu0 %v427
      %706 = vmatprep.subr.mxu0 %v430
      %707 = vmatpush1.msra.mxu0 %v429
      %708 = vmatprep.subr.mxu0 %v432
      %709 = vmatpush1.msra.mxu0 %v431
      %710 = vmatprep.subr.mxu0 %v434
      %711 = vmatpush1.msra.mxu0 %v433
      %712 = vmatprep.subr.mxu0 %v436
      %713 = vmatpush1.msra.mxu0 %v435
      %714 = vmatprep.subr.mxu0 %v438
      %715 = vmatpush1.msra.mxu0 %v437
      %716 = vmatprep.mubr.f32.mxu0 %v182
      %717 = vmatmul.mubr.f32.gmra.mrb[0].mxu0 %v180
      %v718 = vpop.f32.mrb[0].mxu0
      %v719 = vadd.f32 %v648, %v718
      %v720 = vpop.f32.mrb[0].mxu0
      %v721 = vadd.f32 %v650, %v720
      %722 = vdwg.mxu0
      %v723 = vrcp.pop %v719
      %v724 = vmul.f32 %v721, %v723
      %725 = vst [vmem:[%s141] sm:$0xff] %v724
      %p726 = scmp.lt.s32.totalorder %s13, 1
      %s727 = scalar_select %p726, %s13, 1
      %s728 = smul.addr %s727, 8
      %s729 = scalar_lea.vmem %s2, %s728
      // Predicated region
      $region29: #{integral_forward.1} parent=27 // pred_check
        %p730 = pneg %p78
      $region30: #{integral_forward.1} parent=27 // pred_check_branch
        %732 = sbr.rel (%p730) target = $region32
      $region31: #{integral_forward.1} parent=27 // pred_region
        _
      $region32: #{integral_forward.1} parent=27 // pred_fallthru
        _
    $region28: #{integral_forward.1} parent=5 // pred_fallthru
      _
    %p733 = scmp.le.s32.totalorder 2, %s8
    // Predicated region
    $region33: #{integral_forward.1} parent=5 // pred_check
      %p734 = pneg %p733
    $region34: #{integral_forward.1} parent=5 // pred_check_branch
      %736 = sbr.rel (%p734) target = $region36
    $region35: #{integral_forward.1} parent=5 // pred_region
      %s737 = ssub.s32 %s8, 2
      // Predicated region
      $region37: #{integral_forward.1} parent=35 // pred_check
        %p738 = pneg %p84
      $region38: #{integral_forward.1} parent=35 // pred_check_branch
        %740 = sbr.rel (%p738) target = $region40
      $region39: #{integral_forward.1} parent=35 // pred_region
        %p741 = scmp.lt.s32.totalorder %s14, 1
        %s742 = scalar_select %p741, %s14, 1
        %s743 = smul.addr %s742, 8
        %s744 = scalar_lea.vmem %s2, %s743
      $region40: #{integral_forward.1} parent=35 // pred_fallthru
        _
    $region36: #{integral_forward.1} parent=5 // pred_fallthru
      _
  $region6: #{integral_forward.1} parent=0 // loop_footer
    %s12 = sadd.s32 1, %s8
  $region7: #{integral_forward.1} parent=0 // loop_footer_branch
    %7 = sbr.rel target = $region3
  $region8: #{integral_forward.1} parent=0 // loop_exit
    _

</llo_original>
